<compile_context>
chip_gen: v5e
topology: v5e:2x2
jax: 0.10.0
libtpu: 0.0.40
codegen_flags: <defaults>
</compile_context>

<pallas_src>
import functools

import jax
import jax.numpy as jnp
from jax.experimental import pallas as pl
from jax.experimental.pallas import tpu as pltpu


_VMEM_LIMIT_BYTES = 48 * 1024 * 1024      # explicit scoped-VMEM ceiling (fits v7x 64 MiB)
_VMEM_BLOCK_BUDGET = 24 * 1024 * 1024     # target for double-buffered per-grid-step blocks


def _round_up(x, m):
    return (x + m - 1) // m * m


def _layer_norm(x, gamma, beta, eps=1e-5):
    mu = jnp.mean(x, axis=-1, keepdims=True)
    var = jnp.mean((x - mu) ** 2, axis=-1, keepdims=True)
    return (x - mu) * jax.lax.rsqrt(var + eps) * gamma + beta


# ------------------- kernel 1: hoisted input projection ----------------------

def _inproj_ln_kernel(x_ref, wih_ref, gb_ref, o_ref):
    # x rows: (R, I) f32 -> bf16; W_ih: (I, 3H) bf16; native bf16 MXU, f32 accumulate.
    wi = jnp.dot(x_ref[...].astype(jnp.bfloat16), wih_ref[...],
                 preferred_element_type=jnp.float32)
    # LayerNorm(ln_ih) with the GRU bias folded into beta; stored bf16.
    o_ref[...] = _layer_norm(wi, gb_ref[0:1, :], gb_ref[1:2, :]).astype(o_ref.dtype)


# ------------------- kernel 2: sequential recurrence --------------------------

def _gru_recurrent_kernel(lnwi_ref, whh_ref, ghh_ref, len_ref, h0_ref,
                          out_ref, hn_ref, h_scratch,
                          *, hidden_size, chunk, seq_len, use_length, unroll):
    c = pl.program_id(0)

    @pl.when(c == 0)
    def _():
        h_scratch[...] = h0_ref[...]

    H = hidden_size
    # Chunk-invariant values hoisted out of the timestep loop.
    whh = whh_ref[...]                         # (H, 3H) bf16, fed straight to the MXU
    g_hh = ghh_ref[0:1, :]                     # (1, 3H) f32
    b_hh = ghh_ref[1:2, :]                     # (1, 3H) f32
    if use_length:
        lens = len_ref[...]                    # (Bp, 1) int32
    t_base = c * chunk
    guard_tail = (seq_len % chunk) != 0        # static: only when time was padded

    # NOTE: when H is a multiple of 128 the gate slices below are lane-tile aligned
    # (no per-step relayout).  Gate math stays f32 (portable to v5e); bf16 gate
    # nonlinearities on v6e/v7x and a dual-TensorCore batch split on v7x are further
    # generation-specific levers not taken here.
    def step(i, h):
        # Only the h-dependent half of the cell lives in the serial loop.
        wh = jnp.dot(h.astype(jnp.bfloat16), whh, preferred_element_type=jnp.float32)
        ln_wh = _layer_norm(wh, g_hh, b_hh)
        lnwi_t = lnwi_ref[i].astype(jnp.float32)          # (Bp, 3H) LN_ih + bias (bf16)
        reset_gate = jax.nn.sigmoid(lnwi_t[:, :H] + ln_wh[:, :H])
        update_gate = jax.nn.sigmoid(lnwi_t[:, H:2 * H] + ln_wh[:, H:2 * H])
        h_bar = jnp.tanh(ln_wh[:, 2 * H:] * reset_gate + lnwi_t[:, 2 * H:])
        h1 = update_gate * h_bar + (1.0 - update_gate) * h

        if use_length:
            # Sequence-length masking, faithful to MyGRU._forward_rnn (including its
            # use of row 0 of the previous hidden, hx[0], for padded positions).
            keep = lens > (t_base + i)                    # (Bp, 1) bool
            h_next = jnp.where(keep, h1, h[0:1, :])
        else:
            h_next = h1
        if guard_tail:                                    # padded tail timesteps only
            h_next = jnp.where(t_base + i < seq_len, h_next, h)
        out_ref[i] = h_next.astype(out_ref.dtype)
        return h_next

    h_final = jax.lax.fori_loop(0, chunk, step, h_scratch[...], unroll=unroll)
    h_scratch[...] = h_final

    @pl.when(c == pl.num_programs(0) - 1)
    def _():
        hn_ref[...] = h_final.astype(hn_ref.dtype)


# ------------------------------ block sizing ----------------------------------

def _choose_time_chunk(T, Bp, H, max_chunk):
    """Time-chunk for stage 2: VMEM-bounded, preferring an exact divisor of T."""
    def vmem_bytes(c):
        # double-buffered lnwi (bf16) + out (f32) chunk blocks
        return 2 * c * Bp * 3 * H * 2 + 2 * c * Bp * H * 4

    chunk = max(1, min(T, max_chunk))
    while chunk > 1 and vmem_bytes(chunk) > _VMEM_BLOCK_BUDGET:
        chunk //= 2
    # Prefer a chunk that divides T exactly: no padded tail, no per-step tail guard.
    for d in range(chunk, 0, -1):
        if T % d == 0:
            if 2 * d >= chunk:
                return d, T
            break
    return chunk, _round_up(T, chunk)


def _choose_stage1_tblock(Tp, Bp, I, H):
    """Timesteps per stage-1 row block: as large as the VMEM budget allows."""
    def vmem_bytes(t1):
        rb = t1 * Bp
        return 2 * rb * (I * 4 + 3 * H * 2) + 2 * I * 3 * H * 2

    best = 1
    for t1 in range(1, Tp + 1):
        if Tp % t1 == 0 and vmem_bytes(t1) <= _VMEM_BLOCK_BUDGET:
            best = t1
    return best


# ------------------------------ layer wrapper ---------------------------------

def gru_layer_pallas(x, length2d, h0, params, *, chunk, seq_len, use_length):
    """One Ln_GRUCell layer over the whole (already padded) sequence.

    x: (Tp, Bp, I) f32 with batch padded to a multiple of 8 and time padded to a
    multiple of `chunk`; length2d: (Bp, 1) int32; h0: (Bp, H) f32.
    """
    wih, whh, bias, g_ih, b_ih, g_hh, b_hh = params
    Tp, Bp, I = x.shape
    H = h0.shape[-1]

    wih_b = wih.astype(jnp.bfloat16)                        # bf16 weight storage
    whh_b = whh.astype(jnp.bfloat16)
    gb_ih = jnp.concatenate([g_ih, b_ih + bias], axis=0)    # (2, 3H): gamma / beta+bias
    gb_hh = jnp.concatenate([g_hh, b_hh], axis=0)           # (2, 3H)

    # ---- stage 1 (parallel): LN_ih(x @ W_ih) + bias for every timestep at once.
    rows = Tp * Bp
    t1 = _choose_stage1_tblock(Tp, Bp, I, H)
    rb = t1 * Bp
    x2d = x.reshape(rows, I)                                # contiguous -> free reshape

    lnwi2d = pl.pallas_call(
        _inproj_ln_kernel,
        out_shape=jax.ShapeDtypeStruct((rows, 3 * H), jnp.bfloat16),
        grid_spec=pltpu.PrefetchScalarGridSpec(
            num_scalar_prefetch=0,
            grid=(rows // rb,),
            in_specs=[
                pl.BlockSpec((rb, I), lambda r: (r, 0)),        # x rows (f32)
                pl.BlockSpec((I, 3 * H), lambda r: (0, 0)),     # W_ih (bf16)
                pl.BlockSpec((2, 3 * H), lambda r: (0, 0)),     # ln_ih gamma / beta+bias
            ],
            out_specs=pl.BlockSpec((rb, 3 * H), lambda r: (r, 0)),
        ),
        compiler_params=pltpu.CompilerParams(
            dimension_semantics=("parallel",),
            vmem_limit_bytes=_VMEM_LIMIT_BYTES),
    )(x2d, wih_b, gb_ih)
    lnwi = lnwi2d.reshape(Tp, Bp, 3 * H)                    # contiguous -> free reshape

    # ---- stage 2 (sequential): hidden-state recurrence over time chunks.
    kernel = functools.partial(
        _gru_recurrent_kernel, hidden_size=H, chunk=chunk, seq_len=seq_len,
        use_length=use_length, unroll=min(chunk, 8))

    out, hn = pl.pallas_call(
        kernel,
        out_shape=(jax.ShapeDtypeStruct((Tp, Bp, H), jnp.float32),
                   jax.ShapeDtypeStruct((Bp, H), jnp.float32)),
        grid_spec=pltpu.PrefetchScalarGridSpec(
            num_scalar_prefetch=0,
            grid=(Tp // chunk,),
            in_specs=[
                pl.BlockSpec((chunk, Bp, 3 * H), lambda c: (c, 0, 0)),  # LN_wi chunk (bf16)
                pl.BlockSpec((H, 3 * H), lambda c: (0, 0)),             # W_hh (bf16)
                pl.BlockSpec((2, 3 * H), lambda c: (0, 0)),             # ln_hh gamma/beta
                pl.BlockSpec((Bp, 1), lambda c: (0, 0)),                # lengths
                pl.BlockSpec((Bp, H), lambda c: (0, 0)),                # h0
            ],
            out_specs=(pl.BlockSpec((chunk, Bp, H), lambda c: (c, 0, 0)),
                       pl.BlockSpec((Bp, H), lambda c: (0, 0))),
            scratch_shapes=[pltpu.VMEM((Bp, H), jnp.float32)],
        ),
        compiler_params=pltpu.CompilerParams(
            dimension_semantics=("arbitrary",),          # true recurrence over time
            vmem_limit_bytes=_VMEM_LIMIT_BYTES),
    )(lnwi, whh_b, gb_hh, length2d, h0)
    return out, hn


# --------------------------- parameter building -------------------------------

def _orthogonal(key, rows, cols):
    """Deterministic orthogonal init (rows orthonormal if rows <= cols)."""
    a = jax.random.normal(key, (max(rows, cols), min(rows, cols)), jnp.float32)
    q, r = jnp.linalg.qr(a)
    q = q * jnp.sign(jnp.diagonal(r))
    if rows < cols:
        q = q.T
    return q[:rows, :cols].astype(jnp.float32)


def make_mygru_params(key, input_size, hidden_size, num_layers):
    """Replicates Ln_GRUCell.reset_parameters for every layer."""
    params = []
    for layer in range(num_layers):
        li = input_size if layer == 0 else hidden_size
        key, sub = jax.random.split(key)
        weight_ih = _orthogonal(sub, li, 3 * hidden_size)             # orthogonal
        weight_hh = jnp.tile(jnp.eye(hidden_size, dtype=jnp.float32), (1, 3))
        bias = jnp.zeros((1, 3 * hidden_size), jnp.float32)
        g_ih = jnp.ones((1, 3 * hidden_size), jnp.float32)            # LayerNorm gamma
        b_ih = jnp.zeros((1, 3 * hidden_size), jnp.float32)           # LayerNorm beta
        g_hh = jnp.ones((1, 3 * hidden_size), jnp.float32)
        b_hh = jnp.zeros((1, 3 * hidden_size), jnp.float32)
        # TODO(synk): ln_ho exists in the PyTorch cell but is unused in forward().
        params.append((weight_ih, weight_hh, bias, g_ih, b_ih, g_hh, b_hh))
    return params


def mygru_forward(x, params, hidden_size, length=None, hx=None, *, time_chunk=16):
    """MyGRU.forward (batch_first=False, dropout=0).  x: (T, B, input_size)."""
    T, B, _ = x.shape
    use_length = length is not None
    if hx is None:
        hx = jnp.zeros((B, hidden_size), jnp.float32)

    # Pad batch to a multiple of 8 sublanes and time to a multiple of the chunk ONCE;
    # padded rows / steps never influence real ones and everything stays padded until
    # the final slice (no per-layer pads / slices).
    Bp = _round_up(B, 8)
    pad_b = Bp - B
    chunk, Tp = _choose_time_chunk(T, Bp, hidden_size, time_chunk)
    xp = jnp.pad(x, ((0, Tp - T), (0, pad_b), (0, 0)))
    if use_length:
        length2d = jnp.pad(length.astype(jnp.int32), (0, pad_b)).reshape(Bp, 1)
    else:
        length2d = jnp.full((Bp, 1), T, jnp.int32)       # unused inside the kernel
    hxp = jnp.pad(hx.astype(jnp.float32), ((0, pad_b), (0, 0)))

    h_n = []
    layer_input = xp
    for layer_params in params:
        # NOTE: like the PyTorch module, the SAME hx is the initial hidden state for
        # every layer, and dropout=0 -> identity between layers.
        layer_output, layer_hn = gru_layer_pallas(
            layer_input, length2d, hxp, layer_params,
            chunk=chunk, seq_len=T, use_length=use_length)
        layer_input = layer_output
        h_n.append(layer_hn[:B])
    return layer_output[:T, :B, :], jnp.stack(h_n, 0)


# ------------------------------ pure-JAX ref -----------------------------------
# Mirrors the kernel's bf16 weight storage / bf16 lnwi storage so tolerances stay
# tight; not bit-faithful to the float32 PyTorch module (~1e-3 level differences).

def _gru_layer_ref(x, length2d, h0, params):
    wih, whh, bias, g_ih, b_ih, g_hh, b_hh = params
    T = x.shape[0]
    H = h0.shape[-1]
    wih_b = wih.astype(jnp.bfloat16)
    whh_b = whh.astype(jnp.bfloat16)
    beta_ih = b_ih + bias

    def ln(v, g, b, eps=1e-5):
        mu = v.mean(-1, keepdims=True)
        var = ((v - mu) ** 2).mean(-1, keepdims=True)
        return (v - mu) * jax.lax.rsqrt(var + eps) * g + b

    h = h0
    outs = []
    for t in range(T):
        wi = jnp.dot(x[t].astype(jnp.bfloat16), wih_b, preferred_element_type=jnp.float32)
        lwi = ln(wi, g_ih, beta_ih).astype(jnp.bfloat16).astype(jnp.float32)
        wh = jnp.dot(h.astype(jnp.bfloat16), whh_b, preferred_element_type=jnp.float32)
        lwh = ln(wh, g_hh, b_hh)
        r = jax.nn.sigmoid(lwi[:, :H] + lwh[:, :H])
        u = jax.nn.sigmoid(lwi[:, H:2 * H] + lwh[:, H:2 * H])
        hb = jnp.tanh(lwh[:, 2 * H:] * r + lwi[:, 2 * H:])
        h1 = u * hb + (1.0 - u) * h
        keep = length2d > t
        h_next = jnp.where(keep, h1, h[0:1, :])
        outs.append(h_next)
        h = h_next
    return jnp.stack(outs, 0), h


def mygru_ref(x, params, hidden_size, length=None, hx=None):
    T, B, _ = x.shape
    if length is None:
        length = jnp.full((B,), T, dtype=jnp.int32)
    if hx is None:
        hx = jnp.zeros((B, hidden_size), jnp.float32)
    length2d = length.reshape(B, 1).astype(jnp.int32)
    h_n, layer_input = [], x
    for p in params:
        layer_output, layer_hn = _gru_layer_ref(layer_input, length2d, hx, p)
        layer_input = layer_output
        h_n.append(layer_hn)
    return layer_output, jnp.stack(h_n, 0)


# ----------------------------------- main --------------------------------------

if __name__ == "__main__":
    T, B, I, H, L = 8, 4, 32, 32, 2

    key = jax.random.PRNGKey(0)
    kx, kp = jax.random.split(key)
    x = jax.random.normal(kx, (T, B, I), jnp.float32)          # (seq, batch, input)
    params = make_mygru_params(kp, I, H, L)

    # Ragged lengths: exercises the length-mask path.
    length = jnp.array([T, T - 2, T - 5, 3], dtype=jnp.int32)
    out, h_n = mygru_forward(x, params, H, length=length)
    out = jax.block_until_ready(out)
    h_n = jax.block_until_ready(h_n)
    out_ref, h_n_ref = mygru_ref(x, params, H, length=length)
    assert out.shape == (T, B, H) and h_n.shape == (L, B, H)
    assert jnp.allclose(out, out_ref, atol=2e-3, rtol=2e-3), "output mismatch (ragged)"
    assert jnp.allclose(h_n, h_n_ref, atol=2e-3, rtol=2e-3), "h_n mismatch (ragged)"

    # No-length call: exercises the mask-free fast path in the recurrence kernel.
    out2, h_n2 = mygru_forward(x, params, H)
    out2 = jax.block_until_ready(out2)
    out2_ref, h_n2_ref = mygru_ref(x, params, H)
    assert jnp.allclose(out2, out2_ref, atol=2e-3, rtol=2e-3), "output mismatch (full)"
    assert jnp.allclose(h_n2, h_n2_ref, atol=2e-3, rtol=2e-3), "h_n mismatch (full)"

    print("KERNEL_OK")
</pallas_src>

<mosaic_0001>
module attributes {stable_mosaic.version = 11 : i64} {
  func.func @_inproj_ln_kernel(%arg0: i32, %arg1: memref<64x32xf32, #tpu.memory_space<vmem>>, %arg2: memref<32x96xbf16, #tpu.memory_space<vmem>>, %arg3: memref<2x96xf32, #tpu.memory_space<vmem>>, %arg4: memref<64x96xbf16, #tpu.memory_space<vmem>>) attributes {dimension_semantics = [#tpu.dimension_semantics<parallel>], iteration_bounds = array<i64: 1>, scalar_prefetch = 0 : i64, scratch_operands = 0 : i64, tpu.core_type = #tpu.core_type<tc>, window_params = [{transform_indices = @transform_0, window_bounds = array<i64: 64, 32>}, {pipeline_mode = #tpu.pipeline_mode<synchronous>, transform_indices = @transform_1, window_bounds = array<i64: 32, 96>}, {pipeline_mode = #tpu.pipeline_mode<synchronous>, transform_indices = @transform_2, window_bounds = array<i64: 2, 96>}, {transform_indices = @transform_3, window_bounds = array<i64: 64, 96>}]} {
    %c0 = arith.constant 0 : index
    %c0_0 = arith.constant 0 : index
    %0 = vector.load %arg1[%c0, %c0_0] : memref<64x32xf32, #tpu.memory_space<vmem>>, vector<64x32xf32>
    %1 = arith.truncf %0 : vector<64x32xf32> to vector<64x32xbf16>
    %c0_1 = arith.constant 0 : index
    %c0_2 = arith.constant 0 : index
    %2 = vector.load %arg2[%c0_1, %c0_2] : memref<32x96xbf16, #tpu.memory_space<vmem>>, vector<32x96xbf16>
    %cst = arith.constant dense<0.000000e+00> : vector<64x96xf32>
    %3 = tpu.matmul %1, %2, %cst {dimension_numbers = #tpu.dot_dimension_numbers<[1], [0], [0], [1], [0, 0, 1, 1], [], []>} : vector<64x32xbf16>, vector<32x96xbf16>, vector<64x96xf32> -> vector<64x96xf32>
    %c0_3 = arith.constant 0 : index
    %c0_4 = arith.constant 0 : index
    %4 = vector.load %arg3[%c0_3, %c0_4] : memref<2x96xf32, #tpu.memory_space<vmem>>, vector<1x96xf32>
    %c1 = arith.constant 1 : index
    %c0_5 = arith.constant 0 : index
    %5 = vector.load %arg3[%c1, %c0_5] : memref<2x96xf32, #tpu.memory_space<vmem>>, vector<1x96xf32>
    %cst_6 = arith.constant dense<0.000000e+00> : vector<64xf32>
    %6 = vector.multi_reduction <add>, %3, %cst_6 [1] : vector<64x96xf32> to vector<64xf32>
    %7 = vector.shape_cast %6 : vector<64xf32> to vector<64x1xf32>
    %cst_7 = arith.constant 9.600000e+01 : f32
    %8 = vector.broadcast %cst_7 : f32 to vector<64x1xf32>
    %9 = arith.divf %7, %8 : vector<64x1xf32>
    %10 = vector.broadcast %9 : vector<64x1xf32> to vector<64x96xf32>
    %11 = arith.subf %3, %10 : vector<64x96xf32>
    %12 = arith.mulf %11, %11 : vector<64x96xf32>
    %cst_8 = arith.constant dense<0.000000e+00> : vector<64xf32>
    %13 = vector.multi_reduction <add>, %12, %cst_8 [1] : vector<64x96xf32> to vector<64xf32>
    %14 = vector.shape_cast %13 : vector<64xf32> to vector<64x1xf32>
    %cst_9 = arith.constant 9.600000e+01 : f32
    %15 = vector.broadcast %cst_9 : f32 to vector<64x1xf32>
    %16 = arith.divf %14, %15 : vector<64x1xf32>
    %17 = vector.broadcast %9 : vector<64x1xf32> to vector<64x96xf32>
    %18 = arith.subf %3, %17 : vector<64x96xf32>
    %cst_10 = arith.constant 9.99999974E-6 : f32
    %19 = vector.broadcast %cst_10 : f32 to vector<64x1xf32>
    %20 = arith.addf %16, %19 : vector<64x1xf32>
    %21 = math.rsqrt %20 : vector<64x1xf32>
    %22 = vector.broadcast %21 : vector<64x1xf32> to vector<64x96xf32>
    %23 = arith.mulf %18, %22 : vector<64x96xf32>
    %24 = vector.broadcast %4 : vector<1x96xf32> to vector<64x96xf32>
    %25 = arith.mulf %23, %24 : vector<64x96xf32>
    %26 = vector.broadcast %5 : vector<1x96xf32> to vector<64x96xf32>
    %27 = arith.addf %25, %26 : vector<64x96xf32>
    %28 = arith.truncf %27 : vector<64x96xf32> to vector<64x96xbf16>
    %c0_11 = arith.constant 0 : index
    %c0_12 = arith.constant 0 : index
    %29 = vector.load %arg4[%c0_11, %c0_12] : memref<64x96xbf16, #tpu.memory_space<vmem>>, vector<64x96xbf16>
    tpu.vector_store %arg4[%c0_11, %c0_12], %28 {strides = array<i32>} : memref<64x96xbf16, #tpu.memory_space<vmem>>, vector<64x96xbf16>,
    return
  }
  func.func @transform_0(%arg0: i32) -> (i32, i32) {
    %c0_i32 = arith.constant 0 : i32
    %c0_i32_0 = arith.constant 0 : i32
    return %arg0, %c0_i32 : i32, i32
  }
  func.func @transform_1(%arg0: i32) -> (i32, i32) {
    %c0_i32 = arith.constant 0 : i32
    %c0_i32_0 = arith.constant 0 : i32
    %c0_i32_1 = arith.constant 0 : i32
    return %c0_i32, %c0_i32_0 : i32, i32
  }
  func.func @transform_2(%arg0: i32) -> (i32, i32) {
    %c0_i32 = arith.constant 0 : i32
    %c0_i32_0 = arith.constant 0 : i32
    %c0_i32_1 = arith.constant 0 : i32
    return %c0_i32, %c0_i32_0 : i32, i32
  }
  func.func @transform_3(%arg0: i32) -> (i32, i32) {
    %c0_i32 = arith.constant 0 : i32
    %c0_i32_0 = arith.constant 0 : i32
    return %arg0, %c0_i32 : i32, i32
  }
}

</mosaic_0001>

<llo_original>
// kernel: tpu_custom_call.1
$region0: #{tpu_custom_call.1}
  #allocation0 [shape = 'u32[]', space=smem, size = 0x4, offset = 0x4, fixed_abs, tag = 'smem constant byte address 0x4 - core index']
  #allocation1 [shape = 'u32[72,128]{1,0:T(1,128)}', space=vmem, size = 0x9000, scoped, tag = 'internal scratch']
  %s0 = inlined_call_operand.vmem [shape: f32[64,32], index: 0, kind: input, shape index: {}]
  %s1 = inlined_call_operand.vmem [shape: bf16[32,96], index: 1, kind: input, shape index: {}]
  %s2 = inlined_call_operand.vmem [shape: f32[2,96], index: 2, kind: input, shape index: {}]
  %s3 = inlined_call_operand.hbm [shape: bf16[64,96], index: 3, kind: output, shape index: {}]
  %s4 = sld [smem:[#allocation0]]
  $region22: #{tpu_custom_call.1} parent=0
    _
  %s6 = ssub.s32 1, %s4
  %s7 = scalar_select 0, %s6, %s4
  $region1: #{tpu_custom_call.1} parent=0
    #allocation2 [shape = 'u8[16384]{0}', space=vmem, size = 0x4000, scoped, tag = 'output window, operand 0, single buffered']
    #allocation3 [shape = 's32[1]{0}', space=sflag, size = 0x4, scoped, tag = 'scoped memory for tpu_custom_call.1']
    %8 = vsyncpa [#allocation3], 0
    // Predicated region
    $region2: #{tpu_custom_call.1} parent=1 // pred_check
      _
    $region3: #{tpu_custom_call.1} parent=1 // pred_check_branch
      %10 = sbr.rel (0) target = $region5
    $region4: #{tpu_custom_call.1} parent=1 // pred_region
      _
    $region5: #{tpu_custom_call.1} parent=1 // pred_fallthru
      _
    // Predicated region
    $region6: #{tpu_custom_call.1} parent=1 // pred_check
      _
    $region7: #{tpu_custom_call.1} parent=1 // pred_check_branch
      %12 = sbr.rel (0) target = $region9
    $region8: #{tpu_custom_call.1} parent=1 // pred_region
      _
    $region9: #{tpu_custom_call.1} parent=1 // pred_fallthru
      _
    // Predicated region
    $region10: #{tpu_custom_call.1} parent=1 // pred_check
      _
    $region11: #{tpu_custom_call.1} parent=1 // pred_check_branch
      %14 = sbr.rel (0) target = $region13
    $region12: #{tpu_custom_call.1} parent=1 // pred_region
      _
    $region13: #{tpu_custom_call.1} parent=1 // pred_fallthru
      _
    %v16 = vld [vmem:[%s0] sm:$0xff]
    %v17 = vld [vmem:[%s0 + $0x8] sm:$0xff]
    %v18 = vld [vmem:[%s0 + $0x10] sm:$0xff]
    %v19 = vld [vmem:[%s0 + $0x18] sm:$0xff]
    %v20 = vld [vmem:[%s0 + $0x20] sm:$0xff]
    %v21 = vld [vmem:[%s0 + $0x28] sm:$0xff]
    %v22 = vld [vmem:[%s0 + $0x30] sm:$0xff]
    %v23 = vld [vmem:[%s0 + $0x38] sm:$0xff]
    %v24 = vpack.c.bf16 %v17, %v16
    %v25 = vpack.c.bf16 %v19, %v18
    %v26 = vpack.c.bf16 %v21, %v20
    %v27 = vpack.c.bf16 %v23, %v22
    %v28 = vld [vmem:[%s1] sm:$0xf]
    %v29 = vld [vmem:[%s1 + $0x4] sm:$0xf]
    %v30 = vld [vmem:[%s1 + $0x8] sm:$0xf]
    %v31 = vld [vmem:[%s1 + $0xc] sm:$0xf]
    %v36 = vunpack.c.l.b16 %v28
    %v37 = vunpack.c.l.b16 %v29
    %v38 = vunpack.c.l.b16 %v30
    %v39 = vunpack.c.l.b16 %v31
    %v40 = vpack.c.b16 %v37, %v36
    %v41 = vpack.c.b16 %v39, %v38
    %vm44 = vcmask 261120
    %v46 = vsel %vm44, %v24, 0
    %v49 = vsel %vm44, %v25, 0
    %v52 = vsel %vm44, %v26, 0
    %v55 = vsel %vm44, %v27, 0
    %57 = vmatpush.bf16.msra.mxu0 0
    %58 = vmatpush.bf16.msra.mxu0 0
    %59 = vmatpush.bf16.msra.mxu0 0
    %60 = vmatpush.bf16.msra.mxu0 0
    %61 = vmatpush.bf16.msra.mxu0 0
    %62 = vmatpush.bf16.msra.mxu0 0
    %63 = vmatpush.bf16.msra.mxu0 %v41
    %64 = vmatpush.bf16.msra.mxu0 %v40
    %65 = vmatmul.bf16.gmra.mxu0 %v46
    %v66 = vpop.f32.mrf.mxu0
    %v67 = vadd.f32 0.0, %v66
    %v68 = vpop.f32.mrf.mxu0
    %v69 = vadd.f32 0.0, %v68
    %70 = vmatmul.bf16.gmra.mxu0 %v49
    %v71 = vpop.f32.mrf.mxu0
    %v72 = vadd.f32 0.0, %v71
    %v73 = vpop.f32.mrf.mxu0
    %v74 = vadd.f32 0.0, %v73
    %75 = vmatmul.bf16.gmra.mxu0 %v52
    %v76 = vpop.f32.mrf.mxu0
    %v77 = vadd.f32 0.0, %v76
    %v78 = vpop.f32.mrf.mxu0
    %v79 = vadd.f32 0.0, %v78
    %80 = vmatmul.bf16.gmra.mxu0 %v55
    %v81 = vpop.f32.mrf.mxu0
    %v82 = vadd.f32 0.0, %v81
    %v83 = vpop.f32.mrf.mxu0
    %v84 = vadd.f32 0.0, %v83
    %85 = vdwg.mxu0
    %v86 = vld [vmem:[%s2] sm:$0x1]
    %v87 = vld [vmem:[%s2 + $0x1] sm:$0x1]
    %vm88 = vcmask 785408
    %v89 = vsel %vm88, %v67, 0.0
    %90 = vadd.xlane.f32.xlu0 %v89
    %v91 = vpop.xlane.xlu0 %90
    %v92 = vsel %vm88, %v69, 0.0
    %93 = vadd.xlane.f32.xlu0 %v92
    %v94 = vpop.xlane.xlu0 %93
    %v95 = vsel %vm88, %v72, 0.0
    %96 = vadd.xlane.f32.xlu0 %v95
    %v97 = vpop.xlane.xlu0 %96
    %v98 = vsel %vm88, %v74, 0.0
    %99 = vadd.xlane.f32.xlu0 %v98
    %v100 = vpop.xlane.xlu0 %99
    %v101 = vsel %vm88, %v77, 0.0
    %102 = vadd.xlane.f32.xlu0 %v101
    %v103 = vpop.xlane.xlu0 %102
    %v104 = vsel %vm88, %v79, 0.0
    %105 = vadd.xlane.f32.xlu0 %v104
    %v106 = vpop.xlane.xlu0 %105
    %v107 = vsel %vm88, %v82, 0.0
    %108 = vadd.xlane.f32.xlu0 %v107
    %v109 = vpop.xlane.xlu0 %108
    %v110 = vsel %vm88, %v84, 0.0
    %111 = vadd.xlane.f32.xlu0 %v110
    %v112 = vpop.xlane.xlu0 %111
    %v113 = vrcp.pop 96.0
    %v114 = vmul.f32 96.0, %v113
    %v115 = vsub.f32 1.0, %v114
    %v116 = vmul.f32 %v113, %v115
    %v117 = vadd.f32 %v113, %v116
    %vm118 = vweird.f32 %v113
    %v119 = vsel %vm118, %v113, %v117
    %v120 = vmul.f32 %v91, %v119
    %v121 = vmul.f32 %v94, %v119
    %v122 = vmul.f32 %v97, %v119
    %v123 = vmul.f32 %v100, %v119
    %v124 = vmul.f32 %v103, %v119
    %v125 = vmul.f32 %v106, %v119
    %v126 = vmul.f32 %v109, %v119
    %v127 = vmul.f32 %v112, %v119
    %v128 = vsub.f32 %v67, %v120
    %v129 = vsub.f32 %v69, %v121
    %v130 = vsub.f32 %v72, %v122
    %v131 = vsub.f32 %v74, %v123
    %v132 = vsub.f32 %v77, %v124
    %v133 = vsub.f32 %v79, %v125
    %v134 = vsub.f32 %v82, %v126
    %v135 = vsub.f32 %v84, %v127
    %v136 = vmul.f32 %v128, %v128
    %v137 = vmul.f32 %v129, %v129
    %v138 = vmul.f32 %v130, %v130
    %v139 = vmul.f32 %v131, %v131
    %v140 = vmul.f32 %v132, %v132
    %v141 = vmul.f32 %v133, %v133
    %v142 = vmul.f32 %v134, %v134
    %v143 = vmul.f32 %v135, %v135
    %v144 = vsel %vm88, %v136, 0.0
    %145 = vadd.xlane.f32.xlu0 %v144
    %v146 = vpop.xlane.xlu0 %145
    %v147 = vsel %vm88, %v137, 0.0
    %148 = vadd.xlane.f32.xlu0 %v147
    %v149 = vpop.xlane.xlu0 %148
    %v150 = vsel %vm88, %v138, 0.0
    %151 = vadd.xlane.f32.xlu0 %v150
    %v152 = vpop.xlane.xlu0 %151
    %v153 = vsel %vm88, %v139, 0.0
    %154 = vadd.xlane.f32.xlu0 %v153
    %v155 = vpop.xlane.xlu0 %154
    %v156 = vsel %vm88, %v140, 0.0
    %157 = vadd.xlane.f32.xlu0 %v156
    %v158 = vpop.xlane.xlu0 %157
    %v159 = vsel %vm88, %v141, 0.0
    %160 = vadd.xlane.f32.xlu0 %v159
    %v161 = vpop.xlane.xlu0 %160
    %v162 = vsel %vm88, %v142, 0.0
    %163 = vadd.xlane.f32.xlu0 %v162
    %v164 = vpop.xlane.xlu0 %163
    %v165 = vsel %vm88, %v143, 0.0
    %166 = vadd.xlane.f32.xlu0 %v165
    %v167 = vpop.xlane.xlu0 %166
    %v168 = vmul.f32 %v146, %v119
    %v169 = vmul.f32 %v149, %v119
    %v170 = vmul.f32 %v152, %v119
    %v171 = vmul.f32 %v155, %v119
    %v172 = vmul.f32 %v158, %v119
    %v173 = vmul.f32 %v161, %v119
    %v174 = vmul.f32 %v164, %v119
    %v175 = vmul.f32 %v167, %v119
    %v176 = vadd.f32 %v168, 1e-05
    %v177 = vadd.f32 %v169, 1e-05
    %v178 = vadd.f32 %v170, 1e-05
    %v179 = vadd.f32 %v171, 1e-05
    %v180 = vadd.f32 %v172, 1e-05
    %v181 = vadd.f32 %v173, 1e-05
    %v182 = vadd.f32 %v174, 1e-05
    %v183 = vadd.f32 %v175, 1e-05
    %v184 = vrsqrt.pop %v176
    %v185 = vmul.f32 %v184, %v176
    %v186 = vmul.f32 %v185, %v184
    %v187 = vmul.f32 0.5, %v186
    %v188 = vsub.f32 1.5, %v187
    %v189 = vmul.f32 %v184, %v188
    %vm190 = vweird.f32 %v176
    %vm191 = vweird.f32 %v184
    %vm192 = vmor %vm190, %vm191
    %v193 = vsel %vm192, %v184, %v189
    %v194 = vrsqrt.pop %v177
    %v195 = vmul.f32 %v194, %v177
    %v196 = vmul.f32 %v195, %v194
    %v197 = vmul.f32 0.5, %v196
    %v198 = vsub.f32 1.5, %v197
    %v199 = vmul.f32 %v194, %v198
    %vm200 = vweird.f32 %v177
    %vm201 = vweird.f32 %v194
    %vm202 = vmor %vm200, %vm201
    %v203 = vsel %vm202, %v194, %v199
    %v204 = vrsqrt.pop %v178
    %v205 = vmul.f32 %v204, %v178
    %v206 = vmul.f32 %v205, %v204
    %v207 = vmul.f32 0.5, %v206
    %v208 = vsub.f32 1.5, %v207
    %v209 = vmul.f32 %v204, %v208
    %vm210 = vweird.f32 %v178
    %vm211 = vweird.f32 %v204
    %vm212 = vmor %vm210, %vm211
    %v213 = vsel %vm212, %v204, %v209
    %v214 = vrsqrt.pop %v179
    %v215 = vmul.f32 %v214, %v179
    %v216 = vmul.f32 %v215, %v214
    %v217 = vmul.f32 0.5, %v216
    %v218 = vsub.f32 1.5, %v217
    %v219 = vmul.f32 %v214, %v218
    %vm220 = vweird.f32 %v179
    %vm221 = vweird.f32 %v214
    %vm222 = vmor %vm220, %vm221
    %v223 = vsel %vm222, %v214, %v219
    %v224 = vrsqrt.pop %v180
    %v225 = vmul.f32 %v224, %v180
    %v226 = vmul.f32 %v225, %v224
    %v227 = vmul.f32 0.5, %v226
    %v228 = vsub.f32 1.5, %v227
    %v229 = vmul.f32 %v224, %v228
    %vm230 = vweird.f32 %v180
    %vm231 = vweird.f32 %v224
    %vm232 = vmor %vm230, %vm231
    %v233 = vsel %vm232, %v224, %v229
    %v234 = vrsqrt.pop %v181
    %v235 = vmul.f32 %v234, %v181
    %v236 = vmul.f32 %v235, %v234
    %v237 = vmul.f32 0.5, %v236
    %v238 = vsub.f32 1.5, %v237
    %v239 = vmul.f32 %v234, %v238
    %vm240 = vweird.f32 %v181
    %vm241 = vweird.f32 %v234
    %vm242 = vmor %vm240, %vm241
    %v243 = vsel %vm242, %v234, %v239
    %v244 = vrsqrt.pop %v182
    %v245 = vmul.f32 %v244, %v182
    %v246 = vmul.f32 %v245, %v244
    %v247 = vmul.f32 0.5, %v246
    %v248 = vsub.f32 1.5, %v247
    %v249 = vmul.f32 %v244, %v248
    %vm250 = vweird.f32 %v182
    %vm251 = vweird.f32 %v244
    %vm252 = vmor %vm250, %vm251
    %v253 = vsel %vm252, %v244, %v249
    %v254 = vrsqrt.pop %v183
    %v255 = vmul.f32 %v254, %v183
    %v256 = vmul.f32 %v255, %v254
    %v257 = vmul.f32 0.5, %v256
    %v258 = vsub.f32 1.5, %v257
    %v259 = vmul.f32 %v254, %v258
    %vm260 = vweird.f32 %v183
    %vm261 = vweird.f32 %v254
    %vm262 = vmor %vm260, %vm261
    %v263 = vsel %vm262, %v254, %v259
    %v264 = vmul.f32 %v128, %v193
    %v265 = vmul.f32 %v129, %v203
    %v266 = vmul.f32 %v130, %v213
    %v267 = vmul.f32 %v131, %v223
    %v268 = vmul.f32 %v132, %v233
    %v269 = vmul.f32 %v133, %v243
    %v270 = vmul.f32 %v134, %v253
    %v271 = vmul.f32 %v135, %v263
    %v272 = vperm.slane %v86, 0
    %v273 = vmul.f32 %v264, %v272
    %v274 = vmul.f32 %v265, %v272
    %v275 = vmul.f32 %v266, %v272
    %v276 = vmul.f32 %v267, %v272
    %v277 = vmul.f32 %v268, %v272
    %v278 = vmul.f32 %v269, %v272
    %v279 = vmul.f32 %v270, %v272
    %v280 = vmul.f32 %v271, %v272
    %v281 = vperm.slane %v87, 0
    %v282 = vadd.f32 %v273, %v281
    %v283 = vadd.f32 %v274, %v281
    %v284 = vadd.f32 %v275, %v281
    %v285 = vadd.f32 %v276, %v281
    %v286 = vadd.f32 %v277, %v281
    %v287 = vadd.f32 %v278, %v281
    %v288 = vadd.f32 %v279, %v281
    %v289 = vadd.f32 %v280, %v281
    %v290 = vpack.c.bf16 %v282, %v282
    %v291 = vpack.c.bf16 %v283, %v283
    %v292 = vpack.c.bf16 %v284, %v284
    %v293 = vpack.c.bf16 %v285, %v285
    %v294 = vpack.c.bf16 %v286, %v286
    %v295 = vpack.c.bf16 %v287, %v287
    %v296 = vpack.c.bf16 %v288, %v288
    %v297 = vpack.c.bf16 %v289, %v289
    %vm298 = vcmask 781312
    %299 = vst.msk [vmem:[#allocation2] sm:$0xf] %vm298, %v290
    %300 = vst.msk [vmem:[#allocation2 + $0x4] sm:$0xf] %vm298, %v291
    %301 = vst.msk [vmem:[#allocation2 + $0x8] sm:$0xf] %vm298, %v292
    %302 = vst.msk [vmem:[#allocation2 + $0xc] sm:$0xf] %vm298, %v293
    %303 = vst.msk [vmem:[#allocation2 + $0x10] sm:$0xf] %vm298, %v294
    %304 = vst.msk [vmem:[#allocation2 + $0x14] sm:$0xf] %vm298, %v295
    %305 = vst.msk [vmem:[#allocation2 + $0x18] sm:$0xf] %vm298, %v296
    %306 = vst.msk [vmem:[#allocation2 + $0x1c] sm:$0xf] %vm298, %v297
    // Predicated region
    $region14: #{tpu_custom_call.1} parent=1 // pred_check
      _
    $region15: #{tpu_custom_call.1} parent=1 // pred_check_branch
      %308 = sbr.rel (0) target = $region17
    $region16: #{tpu_custom_call.1} parent=1 // pred_region
      %310 = vsyncadd [#allocation3], 0
      %s311 = sshll.u32 [#allocation2], 4
      %s312 = int_to_ptr.vmem [resolvable:$true] %s311
      %s313 = sshll.u32 %s3, 4
      %s314 = int_to_ptr.hbm [resolvable:$true] %s313
      %319 = dma.vmem_to_hbm [thread:$0]  %s312, 512, %s314, [#allocation3], 64, 64, 4
    $region17: #{tpu_custom_call.1} parent=1 // pred_fallthru
      _
    // Predicated region
    $region18: #{tpu_custom_call.1} parent=1 // pred_check
      _
    $region19: #{tpu_custom_call.1} parent=1 // pred_check_branch
      %321 = sbr.rel (0) target = $region21
    $region20: #{tpu_custom_call.1} parent=1 // pred_region
      %323 = dma.done [#allocation3], 512
    $region21: #{tpu_custom_call.1} parent=1 // pred_fallthru
      _
    %324 = vsyncpa [#allocation3], 1

</llo_original>
